<compile_context>
chip_gen: v7x
topology: tpu7x:2x2x1
jax: 0.10.0
libtpu: 0.0.40
codegen_flags: <defaults>
</compile_context>

<pallas_src>
import functools

import jax
import jax.numpy as jnp
from jax.experimental import pallas as pl
from jax.experimental.pallas import tpu as pltpu


_LANE = 128
_MAX_LANE_TILE = 1024


def _round_up(x, m):
    return ((x + m - 1) // m) * m


def _choose_lane_tile(np_pad):
    """Largest multiple-of-128 divisor of np_pad not exceeding _MAX_LANE_TILE."""
    best = _LANE
    t = _LANE
    while t <= min(np_pad, _MAX_LANE_TILE):
        if np_pad % t == 0:
            best = t
        t += _LANE
    return best


# ----------------------------------------------------------------------------
# Pallas kernel: out = W @ X + b [+ skip] [ReLU]  -- one MXU matmul, lane-dense
# ----------------------------------------------------------------------------
def _make_mm_kernel(relu: bool, has_skip: bool):
    def kernel(x_ref, w_ref, b_ref, *rest):
        # x_ref : (K, TP)    bf16   K = 9*Cin, TP = lane tile of N*P (mult of 128)
        # w_ref : (Cout, K)  bf16   grid-invariant (stays resident in VMEM)
        # b_ref : (Cout, 1)  f32
        # skip  : (Cout, TP) f32    optional
        # o_ref : (Cout, TP) f32
        if has_skip:
            skip_ref, o_ref = rest
        else:
            (o_ref,) = rest
        acc = jnp.dot(w_ref[...], x_ref[...], preferred_element_type=jnp.float32)
        acc = acc + b_ref[...]
        if has_skip:
            acc = acc + skip_ref[...]
        if relu:
            acc = jnp.maximum(acc, 0.0)
        o_ref[...] = acc.astype(o_ref.dtype)

    return kernel


def _fused_matmul(patches, w_fold, b, *, skip=None, relu=False,
                  out_dtype=jnp.float32, compute_dtype=jnp.bfloat16):
    """Lane-dense fused matmul + bias (+ skip) (+ ReLU).

    patches: (K, NP)      -- NP = batch*pixels (lane axis), padded to 128 here
    w_fold : (Cout, K)
    b      : (Cout,)
    skip   : (Cout, NP) or None
    returns: (Cout, NP)   f32
    """
    K, NP = patches.shape
    Cout = w_fold.shape[0]
    NP_pad = _round_up(NP, _LANE)
    TP = _choose_lane_tile(NP_pad)

    patches_p = jnp.pad(patches, ((0, 0), (0, NP_pad - NP))).astype(compute_dtype)
    w_c = w_fold.astype(compute_dtype)
    b_c = b.reshape(Cout, 1).astype(jnp.float32)

    in_specs = [
        pl.BlockSpec((K, TP), lambda j: (0, j)),
        pl.BlockSpec((Cout, K), lambda j: (0, 0)),
        pl.BlockSpec((Cout, 1), lambda j: (0, 0)),
    ]
    args = [patches_p, w_c, b_c]
    if skip is not None:
        skip_p = jnp.pad(skip, ((0, 0), (0, NP_pad - NP))).astype(jnp.float32)
        in_specs.append(pl.BlockSpec((Cout, TP), lambda j: (0, j)))
        args.append(skip_p)

    out = pl.pallas_call(
        _make_mm_kernel(relu=relu, has_skip=skip is not None),
        out_shape=jax.ShapeDtypeStruct((Cout, NP_pad), out_dtype),
        grid=(NP_pad // TP,),
        in_specs=in_specs,
        out_specs=pl.BlockSpec((Cout, TP), lambda j: (0, j)),
        compiler_params=pltpu.CompilerParams(dimension_semantics=("parallel",)),
    )(*args)
    return out[:, :NP]


# ----------------------------------------------------------------------------
# Conv2d(k=3, s=2, valid) + bias (+ ReLU); activations in (C, N, H, W) layout
# ----------------------------------------------------------------------------
def conv3x3_s2_pallas(h, w_oihw, b, *, relu=True):
    Cin, N, H, W = h.shape
    Cout = w_oihw.shape[0]
    Ho = (H - 3) // 2 + 1
    Wo = (W - 3) // 2 + 1
    NP = N * Ho * Wo

    # XLA glue: im2col with the 9 taps folded into the contraction dim -> (9*Cin, N*P).
    taps = []
    for kh in range(3):
        for kw in range(3):
            win = h[:, :, kh:kh + 2 * Ho - 1:2, kw:kw + 2 * Wo - 1:2]   # (Cin,N,Ho,Wo)
            taps.append(win.reshape(Cin, NP))
    patches = jnp.concatenate(taps, axis=0)                             # (9*Cin, N*P)
    w_fold = w_oihw.transpose(0, 2, 3, 1).reshape(Cout, 9 * Cin)        # (Cout, 9*Cin)

    out = _fused_matmul(patches, w_fold, b, relu=relu)
    return out.reshape(Cout, N, Ho, Wo)


# ----------------------------------------------------------------------------
# ConvTranspose2d(k=3, s=2, p=0) + bias (+ skip); one matmul per layer
# ----------------------------------------------------------------------------
def conv_transpose3x3_s2_pallas(h, w_iohw, b, *, skip=None):
    Cin, N, H, W = h.shape
    Cout = w_iohw.shape[1]
    Hout, Wout = 2 * H + 1, 2 * W + 1
    NP = N * Hout * Wout

    # XLA glue: zero-dilated (stride 2) + padded (2) input, then stride-1 im2col.
    xdp = jnp.zeros((Cin, N, 2 * H + 3, 2 * W + 3), h.dtype)
    xdp = xdp.at[:, :, 2:2 * H + 1:2, 2:2 * W + 1:2].set(h)
    taps = []
    for kh in range(3):
        for kw in range(3):
            win = xdp[:, :, kh:kh + Hout, kw:kw + Wout]                 # (Cin,N,Hout,Wout)
            taps.append(win.reshape(Cin, NP))
    patches = jnp.concatenate(taps, axis=0)                             # (9*Cin, N*P)

    # ConvTranspose == conv with flipped kernel: wf[co,ci,kh,kw] = w[ci,co,2-kh,2-kw]
    w_flip = jnp.flip(w_iohw, axis=(2, 3)).transpose(1, 0, 2, 3)        # (Cout,Cin,3,3)
    w_fold = w_flip.transpose(0, 2, 3, 1).reshape(Cout, 9 * Cin)

    skip_mat = None if skip is None else skip.reshape(Cout, NP)         # lane-dense skip
    out = _fused_matmul(patches, w_fold, b, skip=skip_mat, relu=False)
    return out.reshape(Cout, N, Hout, Wout)


# ----------------------------------------------------------------------------
# CAE forward (matches the PyTorch module's forward exactly)
# ----------------------------------------------------------------------------
def cae_forward(x_nchw, params, n_levels):
    # channels-major layout (C, N, H, W) end-to-end; single transpose in/out.
    h = x_nchw.transpose(1, 0, 2, 3)
    hs = [h]
    for i in range(n_levels):
        w, b = params["E{}".format(i + 1)]          # (Cout, Cin, 3, 3) OIHW
        h = conv3x3_s2_pallas(h, w, b, relu=True)
        hs.append(h)
    x_hat = hs[-1]
    for i in range(n_levels - 1):
        w, b = params["D{}".format(n_levels - i)]   # (Cin, Cout, 3, 3) IOHW
        x_hat = conv_transpose3x3_s2_pallas(x_hat, w, b, skip=hs[-i - 2])
    w, b = params["D1"]
    x_hat = conv_transpose3x3_s2_pallas(x_hat, w, b)
    return x_hat.transpose(1, 0, 2, 3)              # back to NCHW


# ----------------------------------------------------------------------------
# Pure-JAX reference (lax convolutions, f32) for correctness check
# ----------------------------------------------------------------------------
def ref_forward(x, params, n_levels):
    hi = jax.lax.Precision.HIGHEST

    def conv(x, w_oihw, b):
        y = jax.lax.conv_general_dilated(
            x, w_oihw, (2, 2), "VALID",
            dimension_numbers=("NCHW", "OIHW", "NCHW"), precision=hi)
        return y + b[None, :, None, None]

    def deconv(x, w_iohw, b):
        w = jnp.flip(w_iohw, axis=(2, 3)).transpose(1, 0, 2, 3)   # -> OIHW
        y = jax.lax.conv_general_dilated(
            x, w, (1, 1), [(2, 2), (2, 2)], lhs_dilation=(2, 2),
            dimension_numbers=("NCHW", "OIHW", "NCHW"), precision=hi)
        return y + b[None, :, None, None]

    hs = [x]
    h = x
    for i in range(n_levels):
        w, b = params["E{}".format(i + 1)]
        h = jnp.maximum(conv(h, w, b), 0.0)
        hs.append(h)
    x_hat = hs[-1]
    for i in range(n_levels - 1):
        w, b = params["D{}".format(n_levels - i)]
        x_hat = deconv(x_hat, w, b) + hs[-i - 2]
    w, b = params["D1"]
    return deconv(x_hat, w, b)


# ----------------------------------------------------------------------------
# Deterministic parameter init (uniform(-std, std), like the PyTorch module)
# ----------------------------------------------------------------------------
def init_params(key, channels, std=0.02):
    n_levels = len(channels) - 1
    params = {}
    for i in range(n_levels):
        key, k1, k2 = jax.random.split(key, 3)
        cin, cout = channels[i], channels[i + 1]
        w = jax.random.uniform(k1, (cout, cin, 3, 3), jnp.float32, -std, std)  # OIHW
        b = jax.random.uniform(k2, (cout,), jnp.float32, -std, std)
        params["E{}".format(i + 1)] = (w, b)
    for i in range(n_levels):
        key, k1, k2 = jax.random.split(key, 3)
        cin, cout = channels[-i - 1], channels[-i - 2]
        w = jax.random.uniform(k1, (cin, cout, 3, 3), jnp.float32, -std, std)  # IOHW
        b = jax.random.uniform(k2, (cout,), jnp.float32, -std, std)
        params["D{}".format(n_levels - i)] = (w, b)
    return params


if __name__ == "__main__":
    n_levels = 2
    channels = [4, 8, 16]

    key = jax.random.PRNGKey(0)
    key, kx = jax.random.split(key)
    x = jax.random.normal(kx, (2, 4, 16, 16), jnp.float32)   # NCHW, like PyTorch
    params = init_params(key, channels, std=0.02)

    fwd = jax.jit(functools.partial(cae_forward, n_levels=n_levels))
    out = jax.block_until_ready(fwd(x, params))

    ref = ref_forward(x, params, n_levels)
    assert out.shape == (2, 4, 15, 15), out.shape
    err = float(jnp.max(jnp.abs(out - ref)))
    # bf16 matmul operands with f32 accumulate -> loosened tolerance.
    assert jnp.allclose(out, ref, rtol=5e-2, atol=1e-3), err

    print("KERNEL_OK")
</pallas_src>

<mosaic_0001>
module attributes {stable_mosaic.version = 11 : i64} {
  func.func @kernel(%arg0: i32, %arg1: memref<36x128xbf16, #tpu.memory_space<vmem>>, %arg2: memref<8x36xbf16, #tpu.memory_space<vmem>>, %arg3: memref<8x1xf32, #tpu.memory_space<vmem>>, %arg4: memref<8x128xf32, #tpu.memory_space<vmem>>) attributes {dimension_semantics = [#tpu.dimension_semantics<parallel>], iteration_bounds = array<i64: 1>, scalar_prefetch = 0 : i64, scratch_operands = 0 : i64, tpu.core_type = #tpu.core_type<tc>, window_params = [{transform_indices = @transform_0, window_bounds = array<i64: 36, 128>}, {pipeline_mode = #tpu.pipeline_mode<synchronous>, transform_indices = @transform_1, window_bounds = array<i64: 8, 36>}, {pipeline_mode = #tpu.pipeline_mode<synchronous>, transform_indices = @transform_2, window_bounds = array<i64: 8, 1>}, {transform_indices = @transform_3, window_bounds = array<i64: 8, 128>}]} {
    %c0 = arith.constant 0 : index
    %c0_0 = arith.constant 0 : index
    %0 = vector.load %arg2[%c0, %c0_0] : memref<8x36xbf16, #tpu.memory_space<vmem>>, vector<8x36xbf16>
    %c0_1 = arith.constant 0 : index
    %c0_2 = arith.constant 0 : index
    %1 = vector.load %arg1[%c0_1, %c0_2] : memref<36x128xbf16, #tpu.memory_space<vmem>>, vector<36x128xbf16>
    %cst = arith.constant dense<0.000000e+00> : vector<8x128xf32>
    %2 = tpu.matmul %0, %1, %cst {dimension_numbers = #tpu.dot_dimension_numbers<[1], [0], [0], [1], [0, 0, 1, 1], [], []>} : vector<8x36xbf16>, vector<36x128xbf16>, vector<8x128xf32> -> vector<8x128xf32>
    %c0_3 = arith.constant 0 : index
    %c0_4 = arith.constant 0 : index
    %3 = vector.load %arg3[%c0_3, %c0_4] : memref<8x1xf32, #tpu.memory_space<vmem>>, vector<8x1xf32>
    %4 = vector.broadcast %3 : vector<8x1xf32> to vector<8x128xf32>
    %5 = arith.addf %2, %4 : vector<8x128xf32>
    %cst_5 = arith.constant 0.000000e+00 : f32
    %6 = vector.broadcast %cst_5 : f32 to vector<8x128xf32>
    %7 = arith.maximumf %5, %6 : vector<8x128xf32>
    %c0_6 = arith.constant 0 : index
    %c0_7 = arith.constant 0 : index
    %8 = vector.load %arg4[%c0_6, %c0_7] : memref<8x128xf32, #tpu.memory_space<vmem>>, vector<8x128xf32>
    tpu.vector_store %arg4[%c0_6, %c0_7], %7 {strides = array<i32>} : memref<8x128xf32, #tpu.memory_space<vmem>>, vector<8x128xf32>,
    return
  }
  func.func @transform_0(%arg0: i32) -> (i32, i32) {
    %c0_i32 = arith.constant 0 : i32
    %c0_i32_0 = arith.constant 0 : i32
    return %c0_i32, %arg0 : i32, i32
  }
  func.func @transform_1(%arg0: i32) -> (i32, i32) {
    %c0_i32 = arith.constant 0 : i32
    %c0_i32_0 = arith.constant 0 : i32
    %c0_i32_1 = arith.constant 0 : i32
    return %c0_i32, %c0_i32_0 : i32, i32
  }
  func.func @transform_2(%arg0: i32) -> (i32, i32) {
    %c0_i32 = arith.constant 0 : i32
    %c0_i32_0 = arith.constant 0 : i32
    %c0_i32_1 = arith.constant 0 : i32
    return %c0_i32, %c0_i32_0 : i32, i32
  }
  func.func @transform_3(%arg0: i32) -> (i32, i32) {
    %c0_i32 = arith.constant 0 : i32
    %c0_i32_0 = arith.constant 0 : i32
    return %c0_i32, %arg0 : i32, i32
  }
}

module attributes {stable_mosaic.version = 11 : i64} {
  func.func @kernel(%arg0: i32, %arg1: memref<72x128xbf16, #tpu.memory_space<vmem>>, %arg2: memref<16x72xbf16, #tpu.memory_space<vmem>>, %arg3: memref<16x1xf32, #tpu.memory_space<vmem>>, %arg4: memref<16x128xf32, #tpu.memory_space<vmem>>) attributes {dimension_semantics = [#tpu.dimension_semantics<parallel>], iteration_bounds = array<i64: 1>, scalar_prefetch = 0 : i64, scratch_operands = 0 : i64, tpu.core_type = #tpu.core_type<tc>, window_params = [{transform_indices = @transform_0, window_bounds = array<i64: 72, 128>}, {pipeline_mode = #tpu.pipeline_mode<synchronous>, transform_indices = @transform_1, window_bounds = array<i64: 16, 72>}, {pipeline_mode = #tpu.pipeline_mode<synchronous>, transform_indices = @transform_2, window_bounds = array<i64: 16, 1>}, {transform_indices = @transform_3, window_bounds = array<i64: 16, 128>}]} {
    %c0 = arith.constant 0 : index
    %c0_0 = arith.constant 0 : index
    %0 = vector.load %arg2[%c0, %c0_0] : memref<16x72xbf16, #tpu.memory_space<vmem>>, vector<16x72xbf16>
    %c0_1 = arith.constant 0 : index
    %c0_2 = arith.constant 0 : index
    %1 = vector.load %arg1[%c0_1, %c0_2] : memref<72x128xbf16, #tpu.memory_space<vmem>>, vector<72x128xbf16>
    %cst = arith.constant dense<0.000000e+00> : vector<16x128xf32>
    %2 = tpu.matmul %0, %1, %cst {dimension_numbers = #tpu.dot_dimension_numbers<[1], [0], [0], [1], [0, 0, 1, 1], [], []>} : vector<16x72xbf16>, vector<72x128xbf16>, vector<16x128xf32> -> vector<16x128xf32>
    %c0_3 = arith.constant 0 : index
    %c0_4 = arith.constant 0 : index
    %3 = vector.load %arg3[%c0_3, %c0_4] : memref<16x1xf32, #tpu.memory_space<vmem>>, vector<16x1xf32>
    %4 = vector.broadcast %3 : vector<16x1xf32> to vector<16x128xf32>
    %5 = arith.addf %2, %4 : vector<16x128xf32>
    %cst_5 = arith.constant 0.000000e+00 : f32
    %6 = vector.broadcast %cst_5 : f32 to vector<16x128xf32>
    %7 = arith.maximumf %5, %6 : vector<16x128xf32>
    %c0_6 = arith.constant 0 : index
    %c0_7 = arith.constant 0 : index
    %8 = vector.load %arg4[%c0_6, %c0_7] : memref<16x128xf32, #tpu.memory_space<vmem>>, vector<16x128xf32>
    tpu.vector_store %arg4[%c0_6, %c0_7], %7 {strides = array<i32>} : memref<16x128xf32, #tpu.memory_space<vmem>>, vector<16x128xf32>,
    return
  }
  func.func @transform_0(%arg0: i32) -> (i32, i32) {
    %c0_i32 = arith.constant 0 : i32
    %c0_i32_0 = arith.constant 0 : i32
    return %c0_i32, %arg0 : i32, i32
  }
  func.func @transform_1(%arg0: i32) -> (i32, i32) {
    %c0_i32 = arith.constant 0 : i32
    %c0_i32_0 = arith.constant 0 : i32
    %c0_i32_1 = arith.constant 0 : i32
    return %c0_i32, %c0_i32_0 : i32, i32
  }
  func.func @transform_2(%arg0: i32) -> (i32, i32) {
    %c0_i32 = arith.constant 0 : i32
    %c0_i32_0 = arith.constant 0 : i32
    %c0_i32_1 = arith.constant 0 : i32
    return %c0_i32, %c0_i32_0 : i32, i32
  }
  func.func @transform_3(%arg0: i32) -> (i32, i32) {
    %c0_i32 = arith.constant 0 : i32
    %c0_i32_0 = arith.constant 0 : i32
    return %c0_i32, %arg0 : i32, i32
  }
}

module attributes {stable_mosaic.version = 11 : i64} {
  func.func @kernel(%arg0: i32, %arg1: memref<144x128xbf16, #tpu.memory_space<vmem>>, %arg2: memref<8x144xbf16, #tpu.memory_space<vmem>>, %arg3: memref<8x1xf32, #tpu.memory_space<vmem>>, %arg4: memref<8x128xf32, #tpu.memory_space<vmem>>, %arg5: memref<8x128xf32, #tpu.memory_space<vmem>>) attributes {dimension_semantics = [#tpu.dimension_semantics<parallel>], iteration_bounds = array<i64: 1>, scalar_prefetch = 0 : i64, scratch_operands = 0 : i64, tpu.core_type = #tpu.core_type<tc>, window_params = [{transform_indices = @transform_0, window_bounds = array<i64: 144, 128>}, {pipeline_mode = #tpu.pipeline_mode<synchronous>, transform_indices = @transform_1, window_bounds = array<i64: 8, 144>}, {pipeline_mode = #tpu.pipeline_mode<synchronous>, transform_indices = @transform_2, window_bounds = array<i64: 8, 1>}, {transform_indices = @transform_3, window_bounds = array<i64: 8, 128>}, {transform_indices = @transform_4, window_bounds = array<i64: 8, 128>}]} {
    %c0 = arith.constant 0 : index
    %c0_0 = arith.constant 0 : index
    %0 = vector.load %arg2[%c0, %c0_0] : memref<8x144xbf16, #tpu.memory_space<vmem>>, vector<8x144xbf16>
    %c0_1 = arith.constant 0 : index
    %c0_2 = arith.constant 0 : index
    %1 = vector.load %arg1[%c0_1, %c0_2] : memref<144x128xbf16, #tpu.memory_space<vmem>>, vector<144x128xbf16>
    %cst = arith.constant dense<0.000000e+00> : vector<8x128xf32>
    %2 = tpu.matmul %0, %1, %cst {dimension_numbers = #tpu.dot_dimension_numbers<[1], [0], [0], [1], [0, 0, 1, 1], [], []>} : vector<8x144xbf16>, vector<144x128xbf16>, vector<8x128xf32> -> vector<8x128xf32>
    %c0_3 = arith.constant 0 : index
    %c0_4 = arith.constant 0 : index
    %3 = vector.load %arg3[%c0_3, %c0_4] : memref<8x1xf32, #tpu.memory_space<vmem>>, vector<8x1xf32>
    %4 = vector.broadcast %3 : vector<8x1xf32> to vector<8x128xf32>
    %5 = arith.addf %2, %4 : vector<8x128xf32>
    %c0_5 = arith.constant 0 : index
    %c0_6 = arith.constant 0 : index
    %6 = vector.load %arg4[%c0_5, %c0_6] : memref<8x128xf32, #tpu.memory_space<vmem>>, vector<8x128xf32>
    %7 = arith.addf %5, %6 : vector<8x128xf32>
    %c0_7 = arith.constant 0 : index
    %c0_8 = arith.constant 0 : index
    %8 = vector.load %arg5[%c0_7, %c0_8] : memref<8x128xf32, #tpu.memory_space<vmem>>, vector<8x128xf32>
    tpu.vector_store %arg5[%c0_7, %c0_8], %7 {strides = array<i32>} : memref<8x128xf32, #tpu.memory_space<vmem>>, vector<8x128xf32>,
    return
  }
  func.func @transform_0(%arg0: i32) -> (i32, i32) {
    %c0_i32 = arith.constant 0 : i32
    %c0_i32_0 = arith.constant 0 : i32
    return %c0_i32, %arg0 : i32, i32
  }
  func.func @transform_1(%arg0: i32) -> (i32, i32) {
    %c0_i32 = arith.constant 0 : i32
    %c0_i32_0 = arith.constant 0 : i32
    %c0_i32_1 = arith.constant 0 : i32
    return %c0_i32, %c0_i32_0 : i32, i32
  }
  func.func @transform_2(%arg0: i32) -> (i32, i32) {
    %c0_i32 = arith.constant 0 : i32
    %c0_i32_0 = arith.constant 0 : i32
    %c0_i32_1 = arith.constant 0 : i32
    return %c0_i32, %c0_i32_0 : i32, i32
  }
  func.func @transform_3(%arg0: i32) -> (i32, i32) {
    %c0_i32 = arith.constant 0 : i32
    %c0_i32_0 = arith.constant 0 : i32
    return %c0_i32, %arg0 : i32, i32
  }
  func.func @transform_4(%arg0: i32) -> (i32, i32) {
    %c0_i32 = arith.constant 0 : i32
    %c0_i32_0 = arith.constant 0 : i32
    return %c0_i32, %arg0 : i32, i32
  }
}

module attributes {stable_mosaic.version = 11 : i64} {
  func.func @kernel(%arg0: i32, %arg1: memref<72x512xbf16, #tpu.memory_space<vmem>>, %arg2: memref<4x72xbf16, #tpu.memory_space<vmem>>, %arg3: memref<4x1xf32, #tpu.memory_space<vmem>>, %arg4: memref<4x512xf32, #tpu.memory_space<vmem>>) attributes {dimension_semantics = [#tpu.dimension_semantics<parallel>], iteration_bounds = array<i64: 1>, scalar_prefetch = 0 : i64, scratch_operands = 0 : i64, tpu.core_type = #tpu.core_type<tc>, window_params = [{transform_indices = @transform_0, window_bounds = array<i64: 72, 512>}, {pipeline_mode = #tpu.pipeline_mode<synchronous>, transform_indices = @transform_1, window_bounds = array<i64: 4, 72>}, {pipeline_mode = #tpu.pipeline_mode<synchronous>, transform_indices = @transform_2, window_bounds = array<i64: 4, 1>}, {transform_indices = @transform_3, window_bounds = array<i64: 4, 512>}]} {
    %c0 = arith.constant 0 : index
    %c0_0 = arith.constant 0 : index
    %0 = vector.load %arg2[%c0, %c0_0] : memref<4x72xbf16, #tpu.memory_space<vmem>>, vector<4x72xbf16>
    %c0_1 = arith.constant 0 : index
    %c0_2 = arith.constant 0 : index
    %1 = vector.load %arg1[%c0_1, %c0_2] : memref<72x512xbf16, #tpu.memory_space<vmem>>, vector<72x512xbf16>
    %cst = arith.constant dense<0.000000e+00> : vector<4x512xf32>
    %2 = tpu.matmul %0, %1, %cst {dimension_numbers = #tpu.dot_dimension_numbers<[1], [0], [0], [1], [0, 0, 1, 1], [], []>} : vector<4x72xbf16>, vector<72x512xbf16>, vector<4x512xf32> -> vector<4x512xf32>
    %c0_3 = arith.constant 0 : index
    %c0_4 = arith.constant 0 : index
    %3 = vector.load %arg3[%c0_3, %c0_4] : memref<4x1xf32, #tpu.memory_space<vmem>>, vector<4x1xf32>
    %4 = vector.broadcast %3 : vector<4x1xf32> to vector<4x512xf32>
    %5 = arith.addf %2, %4 : vector<4x512xf32>
    %c0_5 = arith.constant 0 : index
    %c0_6 = arith.constant 0 : index
    %6 = vector.load %arg4[%c0_5, %c0_6] : memref<4x512xf32, #tpu.memory_space<vmem>>, vector<4x512xf32>
    tpu.vector_store %arg4[%c0_5, %c0_6], %5 {strides = array<i32>} : memref<4x512xf32, #tpu.memory_space<vmem>>, vector<4x512xf32>,
    return
  }
  func.func @transform_0(%arg0: i32) -> (i32, i32) {
    %c0_i32 = arith.constant 0 : i32
    %c0_i32_0 = arith.constant 0 : i32
    return %c0_i32, %arg0 : i32, i32
  }
  func.func @transform_1(%arg0: i32) -> (i32, i32) {
    %c0_i32 = arith.constant 0 : i32
    %c0_i32_0 = arith.constant 0 : i32
    %c0_i32_1 = arith.constant 0 : i32
    return %c0_i32, %c0_i32_0 : i32, i32
  }
  func.func @transform_2(%arg0: i32) -> (i32, i32) {
    %c0_i32 = arith.constant 0 : i32
    %c0_i32_0 = arith.constant 0 : i32
    %c0_i32_1 = arith.constant 0 : i32
    return %c0_i32, %c0_i32_0 : i32, i32
  }
  func.func @transform_3(%arg0: i32) -> (i32, i32) {
    %c0_i32 = arith.constant 0 : i32
    %c0_i32_0 = arith.constant 0 : i32
    return %c0_i32, %arg0 : i32, i32
  }
}

</mosaic_0001>

<llo_original>
// kernel: cae_forward.4
$region0: #{cae_forward.4}
  #allocation0 [shape = 'u32[]', space=smem, size = 0x4, offset = 0x4, fixed_abs, tag = 'smem constant byte address 0x4 - core index']
  #allocation1 [shape = 'u32[144,128]{1,0:T(1,128)}', space=vmem, size = 0x12000, scoped, tag = 'internal scratch']
  %s0 = inlined_call_operand.vmem [shape: bf16[36,128], index: 0, kind: input, shape index: {}]
  %s1 = inlined_call_operand.vmem [shape: bf16[8,36], index: 1, kind: input, shape index: {}]
  %s2 = inlined_call_operand.vmem [shape: f32[8,1], index: 2, kind: input, shape index: {}]
  %s3 = inlined_call_operand.vmem [shape: f32[8,128], index: 3, kind: output, shape index: {}]
  %s4 = sld [smem:[#allocation0]]
  $region22: #{cae_forward.4} parent=0
    _
  %s6 = ssub.s32 1, %s4
  %s7 = scalar_select 0, %s6, %s4
  // Predicated region
  $region2: #{cae_forward.4} parent=0 // pred_check
    _
  $region3: #{cae_forward.4} parent=0 // pred_check_branch
    %9 = sbr.rel (0) target = $region5
  $region4: #{cae_forward.4} parent=0 // pred_region
    _
  $region5: #{cae_forward.4} parent=0 // pred_fallthru
    _
  // Predicated region
  $region6: #{cae_forward.4} parent=0 // pred_check
    _
  $region7: #{cae_forward.4} parent=0 // pred_check_branch
    %11 = sbr.rel (0) target = $region9
  $region8: #{cae_forward.4} parent=0 // pred_region
    _
  $region9: #{cae_forward.4} parent=0 // pred_fallthru
    _
  // Predicated region
  $region10: #{cae_forward.4} parent=0 // pred_check
    _
  $region11: #{cae_forward.4} parent=0 // pred_check_branch
    %13 = sbr.rel (0) target = $region13
  $region12: #{cae_forward.4} parent=0 // pred_region
    _
  $region13: #{cae_forward.4} parent=0 // pred_fallthru
    _
  %v15 = vld [vmem:[%s1] sm:$0xf]
  %v16 = vld [vmem:[%s0] sm:$0xf]
  %v17 = vld [vmem:[%s0 + $0x4] sm:$0xf]
  %v18 = vld [vmem:[%s0 + $0x8] sm:$0xf]
  %v19 = vld [vmem:[%s0 + $0xc] sm:$0xf]
  %v20 = vld [vmem:[%s0 + $0x10] sm:$0x3]
  %v21 = vld [vmem:[%s2] sm:$0xff]
  %23 = vset.pattern.permute.xlu0 0
  %24 = vperm.xlu0 %23, %v21
  %v25 = vpop.permute.xlu0 %24
  %v32 = vunpack.c.l.b16 %v16
  %v33 = vunpack.c.l.b16 %v17
  %v34 = vunpack.c.l.b16 %v18
  %v35 = vunpack.c.l.b16 %v19
  %v36 = vunpack.c.l.b16 %v20
  %v37 = vpack.c.b16 %v33, %v32
  %v38 = vpack.c.b16 %v35, %v34
  %v39 = vpack.c.b16 %v36, %v36
  %vm42 = vcmask 293888
  %v44 = vsel %vm42, %v15, 0
  %vm46 = vcmask 1041408
  %v48 = vsel %vm46, %v39, 0
  %50 = vmatprep.subr.bf16.mxu0 0
  %51 = vmatpush1.bf16.msra.mxu0 %v37
  %52 = vmatprep.subr.bf16.mxu0 0
  %53 = vmatpush1.bf16.msra.mxu0 %v38
  %54 = vmatprep.subr.bf16.mxu0 0
  %55 = vmatpush1.bf16.msra.mxu0 %v48
  %56 = vmatprep.subr.bf16.mxu0 0
  %57 = vmatpush1.bf16.msra.mxu0 0
  %58 = vmatprep.subr.bf16.mxu0 0
  %59 = vmatpush1.bf16.msra.mxu0 0
  %60 = vmatprep.subr.bf16.mxu0 0
  %61 = vmatpush1.bf16.msra.mxu0 0
  %62 = vmatprep.subr.bf16.mxu0 0
  %63 = vmatpush1.bf16.msra.mxu0 0
  %64 = vmatprep.subr.bf16.mxu0 0
  %65 = vmatpush1.bf16.msra.mxu0 0
  %66 = vmatprep.subr.bf16.mxu0 0
  %67 = vmatpush1.bf16.msra.mxu0 0
  %68 = vmatprep.subr.bf16.mxu0 0
  %69 = vmatpush1.bf16.msra.mxu0 0
  %70 = vmatprep.subr.bf16.mxu0 0
  %71 = vmatpush1.bf16.msra.mxu0 0
  %72 = vmatprep.subr.bf16.mxu0 0
  %73 = vmatpush1.bf16.msra.mxu0 0
  %74 = vmatprep.subr.bf16.mxu0 0
  %75 = vmatpush1.bf16.msra.mxu0 0
  %76 = vmatprep.subr.bf16.mxu0 0
  %77 = vmatpush1.bf16.msra.mxu0 0
  %78 = vmatprep.subr.bf16.mxu0 0
  %79 = vmatpush1.bf16.msra.mxu0 0
  %80 = vmatprep.subr.bf16.mxu0 0
  %81 = vmatpush1.bf16.msra.mxu0 0
  %82 = vmatprep.mubr.bf16.mxu0 0
  %83 = vmatmul.mubr.bf16.gmra.mrb[0].mxu0 %v44
  %v84 = vpop.f32.mrb[0].mxu0
  %v85 = vadd.f32 %v25, %v84
  %v86 = vpop.f32.mrb[0].mxu0
  %v87 = vpop.f32.mrb[0].mxu0
  %v88 = vpop.f32.mrb[0].mxu0
  %89 = vdwg.mxu0
  %v90 = vmax.f32 %v85, 0.0
  %91 = vst [vmem:[%s3] sm:$0xff] %v90
  // Predicated region
  $region14: #{cae_forward.4} parent=0 // pred_check
    _
  $region15: #{cae_forward.4} parent=0 // pred_check_branch
    %93 = sbr.rel (0) target = $region17
  $region16: #{cae_forward.4} parent=0 // pred_region
    _
  $region17: #{cae_forward.4} parent=0 // pred_fallthru
    _
  // Predicated region
  $region18: #{cae_forward.4} parent=0 // pred_check
    _
  $region19: #{cae_forward.4} parent=0 // pred_check_branch
    %95 = sbr.rel (0) target = $region21
  $region20: #{cae_forward.4} parent=0 // pred_region
    _
  $region21: #{cae_forward.4} parent=0 // pred_fallthru
    _

// kernel: cae_forward.5
$region0: #{cae_forward.5}
  #allocation0 [shape = 'u32[]', space=smem, size = 0x4, offset = 0x4, fixed_abs, tag = 'smem constant byte address 0x4 - core index']
  #allocation1 [shape = 'u32[144,128]{1,0:T(1,128)}', space=vmem, size = 0x12000, scoped, tag = 'internal scratch']
  %s0 = inlined_call_operand.vmem [shape: bf16[72,128], index: 0, kind: input, shape index: {}]
  %s1 = inlined_call_operand.vmem [shape: bf16[16,72], index: 1, kind: input, shape index: {}]
  %s2 = inlined_call_operand.vmem [shape: f32[16,1], index: 2, kind: input, shape index: {}]
  %s3 = inlined_call_operand.vmem [shape: f32[16,128], index: 3, kind: output, shape index: {}]
  %s4 = sld [smem:[#allocation0]]
  $region22: #{cae_forward.5} parent=0
    _
  %s6 = ssub.s32 1, %s4
  %s7 = scalar_select 0, %s6, %s4
  // Predicated region
  $region2: #{cae_forward.5} parent=0 // pred_check
    _
  $region3: #{cae_forward.5} parent=0 // pred_check_branch
    %9 = sbr.rel (0) target = $region5
  $region4: #{cae_forward.5} parent=0 // pred_region
    _
  $region5: #{cae_forward.5} parent=0 // pred_fallthru
    _
  // Predicated region
  $region6: #{cae_forward.5} parent=0 // pred_check
    _
  $region7: #{cae_forward.5} parent=0 // pred_check_branch
    %11 = sbr.rel (0) target = $region9
  $region8: #{cae_forward.5} parent=0 // pred_region
    _
  $region9: #{cae_forward.5} parent=0 // pred_fallthru
    _
  // Predicated region
  $region10: #{cae_forward.5} parent=0 // pred_check
    _
  $region11: #{cae_forward.5} parent=0 // pred_check_branch
    %13 = sbr.rel (0) target = $region13
  $region12: #{cae_forward.5} parent=0 // pred_region
    _
  $region13: #{cae_forward.5} parent=0 // pred_fallthru
    _
  %v15 = vld [vmem:[%s1] sm:$0xf]
  %v16 = vld [vmem:[%s1 + $0x4] sm:$0xf]
  %v17 = vld [vmem:[%s0] sm:$0xf]
  %v18 = vld [vmem:[%s0 + $0x4] sm:$0xf]
  %v19 = vld [vmem:[%s0 + $0x8] sm:$0xf]
  %v20 = vld [vmem:[%s0 + $0xc] sm:$0xf]
  %v21 = vld [vmem:[%s0 + $0x10] sm:$0xf]
  %v22 = vld [vmem:[%s0 + $0x14] sm:$0xf]
  %v23 = vld [vmem:[%s0 + $0x18] sm:$0xf]
  %v24 = vld [vmem:[%s0 + $0x1c] sm:$0xf]
  %v25 = vld [vmem:[%s0 + $0x20] sm:$0xf]
  %v26 = vld [vmem:[%s2] sm:$0xff]
  %v27 = vld [vmem:[%s2 + $0x8] sm:$0xff]
  %29 = vset.pattern.permute.xlu0 0
  %30 = vperm.xlu0 %29, %v26
  %v31 = vpop.permute.xlu0 %30
  %34 = vset.pattern.permute.xlu0 0
  %35 = vperm.xlu0 %34, %v27
  %v36 = vpop.permute.xlu0 %35
  %v40 = vunpack.c.l.b16 %v15
  %v41 = vunpack.c.l.b16 %v16
  %v42 = vpack.c.b16 %v41, %v40
  %v52 = vunpack.c.l.b16 %v17
  %v53 = vunpack.c.l.b16 %v18
  %v54 = vunpack.c.l.b16 %v19
  %v55 = vunpack.c.l.b16 %v20
  %v56 = vunpack.c.l.b16 %v21
  %v57 = vunpack.c.l.b16 %v22
  %v58 = vunpack.c.l.b16 %v23
  %v59 = vunpack.c.l.b16 %v24
  %v60 = vunpack.c.l.b16 %v25
  %v61 = vpack.c.b16 %v53, %v52
  %v62 = vpack.c.b16 %v55, %v54
  %v63 = vpack.c.b16 %v57, %v56
  %v64 = vpack.c.b16 %v59, %v58
  %v65 = vpack.c.b16 %v60, %v60
  %vm70 = vcmask 588800
  %v72 = vsel %vm70, %v42, 0
  %vm74 = vcmask 1043456
  %v76 = vsel %vm74, %v65, 0
  %78 = vmatprep.subr.bf16.mxu0 0
  %79 = vmatpush1.bf16.msra.mxu0 %v61
  %80 = vmatprep.subr.bf16.mxu0 0
  %81 = vmatpush1.bf16.msra.mxu0 %v62
  %82 = vmatprep.subr.bf16.mxu0 0
  %83 = vmatpush1.bf16.msra.mxu0 %v63
  %84 = vmatprep.subr.bf16.mxu0 0
  %85 = vmatpush1.bf16.msra.mxu0 %v64
  %86 = vmatprep.subr.bf16.mxu0 0
  %87 = vmatpush1.bf16.msra.mxu0 %v76
  %88 = vmatprep.subr.bf16.mxu0 0
  %89 = vmatpush1.bf16.msra.mxu0 0
  %90 = vmatprep.subr.bf16.mxu0 0
  %91 = vmatpush1.bf16.msra.mxu0 0
  %92 = vmatprep.subr.bf16.mxu0 0
  %93 = vmatpush1.bf16.msra.mxu0 0
  %94 = vmatprep.subr.bf16.mxu0 0
  %95 = vmatpush1.bf16.msra.mxu0 0
  %96 = vmatprep.subr.bf16.mxu0 0
  %97 = vmatpush1.bf16.msra.mxu0 0
  %98 = vmatprep.subr.bf16.mxu0 0
  %99 = vmatpush1.bf16.msra.mxu0 0
  %100 = vmatprep.subr.bf16.mxu0 0
  %101 = vmatpush1.bf16.msra.mxu0 0
  %102 = vmatprep.subr.bf16.mxu0 0
  %103 = vmatpush1.bf16.msra.mxu0 0
  %104 = vmatprep.subr.bf16.mxu0 0
  %105 = vmatpush1.bf16.msra.mxu0 0
  %106 = vmatprep.subr.bf16.mxu0 0
  %107 = vmatpush1.bf16.msra.mxu0 0
  %108 = vmatprep.subr.bf16.mxu0 0
  %109 = vmatpush1.bf16.msra.mxu0 0
  %110 = vmatprep.mubr.bf16.mxu0 0
  %111 = vmatmul.mubr.bf16.gmra.mrb[0].mxu0 %v72
  %v112 = vpop.f32.mrb[0].mxu0
  %v113 = vadd.f32 %v31, %v112
  %v114 = vpop.f32.mrb[0].mxu0
  %v115 = vpop.f32.mrb[0].mxu0
  %v116 = vadd.f32 %v36, %v115
  %v117 = vpop.f32.mrb[0].mxu0
  %118 = vdwg.mxu0
  %v119 = vmax.f32 %v113, 0.0
  %v120 = vmax.f32 %v116, 0.0
  %121 = vst [vmem:[%s3] sm:$0xff] %v119
  %122 = vst [vmem:[%s3 + $0x8] sm:$0xff] %v120
  // Predicated region
  $region14: #{cae_forward.5} parent=0 // pred_check
    _
  $region15: #{cae_forward.5} parent=0 // pred_check_branch
    %124 = sbr.rel (0) target = $region17
  $region16: #{cae_forward.5} parent=0 // pred_region
    _
  $region17: #{cae_forward.5} parent=0 // pred_fallthru
    _
  // Predicated region
  $region18: #{cae_forward.5} parent=0 // pred_check
    _
  $region19: #{cae_forward.5} parent=0 // pred_check_branch
    %126 = sbr.rel (0) target = $region21
  $region20: #{cae_forward.5} parent=0 // pred_region
    _
  $region21: #{cae_forward.5} parent=0 // pred_fallthru
    _

// kernel: cae_forward.6
$region0: #{cae_forward.6}
  #allocation0 [shape = 'u32[]', space=smem, size = 0x4, offset = 0x4, fixed_abs, tag = 'smem constant byte address 0x4 - core index']
  #allocation1 [shape = 'u32[144,128]{1,0:T(1,128)}', space=vmem, size = 0x12000, scoped, tag = 'internal scratch']
  %s0 = inlined_call_operand.vmem [shape: bf16[144,128], index: 0, kind: input, shape index: {}]
  %s1 = inlined_call_operand.vmem [shape: bf16[8,144], index: 1, kind: input, shape index: {}]
  %s2 = inlined_call_operand.vmem [shape: f32[8,1], index: 2, kind: input, shape index: {}]
  %s3 = inlined_call_operand.vmem [shape: f32[8,128], index: 3, kind: input, shape index: {}]
  %s4 = inlined_call_operand.vmem [shape: f32[8,128], index: 4, kind: output, shape index: {}]
  %s5 = sld [smem:[#allocation0]]
  $region26: #{cae_forward.6} parent=0
    _
  %s7 = ssub.s32 1, %s5
  %s8 = scalar_select 0, %s7, %s5
  // Predicated region
  $region2: #{cae_forward.6} parent=0 // pred_check
    _
  $region3: #{cae_forward.6} parent=0 // pred_check_branch
    %10 = sbr.rel (0) target = $region5
  $region4: #{cae_forward.6} parent=0 // pred_region
    _
  $region5: #{cae_forward.6} parent=0 // pred_fallthru
    _
  // Predicated region
  $region6: #{cae_forward.6} parent=0 // pred_check
    _
  $region7: #{cae_forward.6} parent=0 // pred_check_branch
    %12 = sbr.rel (0) target = $region9
  $region8: #{cae_forward.6} parent=0 // pred_region
    _
  $region9: #{cae_forward.6} parent=0 // pred_fallthru
    _
  // Predicated region
  $region10: #{cae_forward.6} parent=0 // pred_check
    _
  $region11: #{cae_forward.6} parent=0 // pred_check_branch
    %14 = sbr.rel (0) target = $region13
  $region12: #{cae_forward.6} parent=0 // pred_region
    _
  $region13: #{cae_forward.6} parent=0 // pred_fallthru
    _
  // Predicated region
  $region14: #{cae_forward.6} parent=0 // pred_check
    _
  $region15: #{cae_forward.6} parent=0 // pred_check_branch
    %16 = sbr.rel (0) target = $region17
  $region16: #{cae_forward.6} parent=0 // pred_region
    _
  $region17: #{cae_forward.6} parent=0 // pred_fallthru
    _
  %v18 = vld [vmem:[%s1] sm:$0xff]
  %v19 = vld [vmem:[%s0] sm:$0xf]
  %v20 = vld [vmem:[%s0 + $0x4] sm:$0xf]
  %v21 = vld [vmem:[%s0 + $0x8] sm:$0xf]
  %v22 = vld [vmem:[%s0 + $0xc] sm:$0xf]
  %v23 = vld [vmem:[%s0 + $0x10] sm:$0xf]
  %v24 = vld [vmem:[%s0 + $0x14] sm:$0xf]
  %v25 = vld [vmem:[%s0 + $0x18] sm:$0xf]
  %v26 = vld [vmem:[%s0 + $0x1c] sm:$0xf]
  %v27 = vld [vmem:[%s0 + $0x20] sm:$0xf]
  %v28 = vld [vmem:[%s0 + $0x24] sm:$0xf]
  %v29 = vld [vmem:[%s0 + $0x28] sm:$0xf]
  %v30 = vld [vmem:[%s0 + $0x2c] sm:$0xf]
  %v31 = vld [vmem:[%s0 + $0x30] sm:$0xf]
  %v32 = vld [vmem:[%s0 + $0x34] sm:$0xf]
  %v33 = vld [vmem:[%s0 + $0x38] sm:$0xf]
  %v34 = vld [vmem:[%s0 + $0x3c] sm:$0xf]
  %v35 = vld [vmem:[%s0 + $0x40] sm:$0xf]
  %v36 = vld [vmem:[%s0 + $0x44] sm:$0xf]
  %v37 = vld [vmem:[%s2] sm:$0xff]
  %39 = vset.pattern.permute.xlu0 0
  %40 = vperm.xlu0 %39, %v37
  %v41 = vpop.permute.xlu0 %40
  %v44 = vunpack.c.l.b16 %v18
  %v45 = vunpack.c.h.b16 %v18
  %v46 = vpack.c.b16 %v44, %v44
  %v47 = vpack.c.b16 %v45, %v45
  %v67 = vunpack.c.l.b16 %v19
  %v68 = vunpack.c.l.b16 %v20
  %v69 = vunpack.c.l.b16 %v21
  %v70 = vunpack.c.l.b16 %v22
  %v71 = vunpack.c.l.b16 %v23
  %v72 = vunpack.c.l.b16 %v24
  %v73 = vunpack.c.l.b16 %v25
  %v74 = vunpack.c.l.b16 %v26
  %v75 = vunpack.c.l.b16 %v27
  %v76 = vunpack.c.l.b16 %v28
  %v77 = vunpack.c.l.b16 %v29
  %v78 = vunpack.c.l.b16 %v30
  %v79 = vunpack.c.l.b16 %v31
  %v80 = vunpack.c.l.b16 %v32
  %v81 = vunpack.c.l.b16 %v33
  %v82 = vunpack.c.l.b16 %v34
  %v83 = vunpack.c.l.b16 %v35
  %v84 = vunpack.c.l.b16 %v36
  %v85 = vpack.c.b16 %v68, %v67
  %v86 = vpack.c.b16 %v70, %v69
  %v87 = vpack.c.b16 %v72, %v71
  %v88 = vpack.c.b16 %v74, %v73
  %v89 = vpack.c.b16 %v76, %v75
  %v90 = vpack.c.b16 %v78, %v77
  %v91 = vpack.c.b16 %v80, %v79
  %v92 = vpack.c.b16 %v82, %v81
  %v93 = vpack.c.b16 %v84, %v83
  %vm103 = vcmask 130048
  %v105 = vsel %vm103, %v47, 0
  %107 = vmatprep.subr.bf16.mxu0 0
  %108 = vmatpush1.bf16.msra.mxu0 %v85
  %109 = vmatprep.subr.bf16.mxu0 0
  %110 = vmatpush1.bf16.msra.mxu0 %v86
  %111 = vmatprep.subr.bf16.mxu0 0
  %112 = vmatpush1.bf16.msra.mxu0 %v87
  %113 = vmatprep.subr.bf16.mxu0 0
  %114 = vmatpush1.bf16.msra.mxu0 %v88
  %115 = vmatprep.subr.bf16.mxu0 0
  %116 = vmatpush1.bf16.msra.mxu0 %v89
  %117 = vmatprep.subr.bf16.mxu0 0
  %118 = vmatpush1.bf16.msra.mxu0 %v90
  %119 = vmatprep.subr.bf16.mxu0 0
  %120 = vmatpush1.bf16.msra.mxu0 %v91
  %121 = vmatprep.subr.bf16.mxu0 0
  %122 = vmatpush1.bf16.msra.mxu0 %v92
  %123 = vmatprep.subr.bf16.mxu0 0
  %124 = vmatpush1.bf16.msra.mxu0 %v93
  %125 = vmatprep.subr.bf16.mxu0 0
  %126 = vmatpush1.bf16.msra.mxu0 0
  %127 = vmatprep.subr.bf16.mxu0 0
  %128 = vmatpush1.bf16.msra.mxu0 0
  %129 = vmatprep.subr.bf16.mxu0 0
  %130 = vmatpush1.bf16.msra.mxu0 0
  %131 = vmatprep.subr.bf16.mxu0 0
  %132 = vmatpush1.bf16.msra.mxu0 0
  %133 = vmatprep.subr.bf16.mxu0 0
  %134 = vmatpush1.bf16.msra.mxu0 0
  %135 = vmatprep.subr.bf16.mxu0 0
  %136 = vmatpush1.bf16.msra.mxu0 0
  %137 = vmatprep.subr.bf16.mxu0 0
  %138 = vmatpush1.bf16.msra.mxu0 0
  %139 = vmatprep.mubr.bf16.mxu0 %v105
  %140 = vmatmul.mubr.bf16.gmra.mrb[0].mxu0 %v46
  %v141 = vpop.f32.mrb[0].mxu0
  %v142 = vadd.f32 %v41, %v141
  %v143 = vpop.f32.mrb[0].mxu0
  %v144 = vpop.f32.mrb[0].mxu0
  %v145 = vpop.f32.mrb[0].mxu0
  %146 = vdwg.mxu0
  %v147 = vld [vmem:[%s3] sm:$0xff]
  %v148 = vadd.f32 %v142, %v147
  %149 = vst [vmem:[%s4] sm:$0xff] %v148
  // Predicated region
  $region18: #{cae_forward.6} parent=0 // pred_check
    _
  $region19: #{cae_forward.6} parent=0 // pred_check_branch
    %151 = sbr.rel (0) target = $region21
  $region20: #{cae_forward.6} parent=0 // pred_region
    _
  $region21: #{cae_forward.6} parent=0 // pred_fallthru
    _
  // Predicated region
  $region22: #{cae_forward.6} parent=0 // pred_check
    _
  $region23: #{cae_forward.6} parent=0 // pred_check_branch
    %153 = sbr.rel (0) target = $region25
  $region24: #{cae_forward.6} parent=0 // pred_region
    _
  $region25: #{cae_forward.6} parent=0 // pred_fallthru
    _

// kernel: cae_forward.7
$region0: #{cae_forward.7}
  #allocation0 [shape = 'u32[]', space=smem, size = 0x4, offset = 0x4, fixed_abs, tag = 'smem constant byte address 0x4 - core index']
  #allocation1 [shape = 'u32[144,128]{1,0:T(1,128)}', space=vmem, size = 0x12000, scoped, tag = 'internal scratch']
  %s0 = inlined_call_operand.vmem [shape: bf16[72,512], index: 0, kind: input, shape index: {}]
  %s1 = inlined_call_operand.vmem [shape: bf16[4,72], index: 1, kind: input, shape index: {}]
  %s2 = inlined_call_operand.vmem [shape: f32[4,1], index: 2, kind: input, shape index: {}]
  %s3 = inlined_call_operand.vmem [shape: f32[4,512], index: 3, kind: output, shape index: {}]
  %s4 = sld [smem:[#allocation0]]
  $region22: #{cae_forward.7} parent=0
    _
  %s6 = ssub.s32 1, %s4
  %s7 = scalar_select 0, %s6, %s4
  // Predicated region
  $region2: #{cae_forward.7} parent=0 // pred_check
    _
  $region3: #{cae_forward.7} parent=0 // pred_check_branch
    %9 = sbr.rel (0) target = $region5
  $region4: #{cae_forward.7} parent=0 // pred_region
    _
  $region5: #{cae_forward.7} parent=0 // pred_fallthru
    _
  // Predicated region
  $region6: #{cae_forward.7} parent=0 // pred_check
    _
  $region7: #{cae_forward.7} parent=0 // pred_check_branch
    %11 = sbr.rel (0) target = $region9
  $region8: #{cae_forward.7} parent=0 // pred_region
    _
  $region9: #{cae_forward.7} parent=0 // pred_fallthru
    _
  // Predicated region
  $region10: #{cae_forward.7} parent=0 // pred_check
    _
  $region11: #{cae_forward.7} parent=0 // pred_check_branch
    %13 = sbr.rel (0) target = $region13
  $region12: #{cae_forward.7} parent=0 // pred_region
    _
  $region13: #{cae_forward.7} parent=0 // pred_fallthru
    _
  %v15 = vld [vmem:[%s1] sm:$0x3]
  %v16 = vld [vmem:[%s0] sm:$0xff]
  %v17 = vld [vmem:[%s0 + $0x8] sm:$0xff]
  %v18 = vld [vmem:[%s0 + $0x10] sm:$0xff]
  %v19 = vld [vmem:[%s0 + $0x18] sm:$0xff]
  %v20 = vld [vmem:[%s0 + $0x20] sm:$0xff]
  %v21 = vld [vmem:[%s0 + $0x28] sm:$0xff]
  %v22 = vld [vmem:[%s0 + $0x30] sm:$0xff]
  %v23 = vld [vmem:[%s0 + $0x38] sm:$0xff]
  %v24 = vld [vmem:[%s0 + $0x40] sm:$0xff]
  %v25 = vld [vmem:[%s0 + $0x48] sm:$0xff]
  %v26 = vld [vmem:[%s0 + $0x50] sm:$0xff]
  %v27 = vld [vmem:[%s0 + $0x58] sm:$0xff]
  %v28 = vld [vmem:[%s0 + $0x60] sm:$0xff]
  %v29 = vld [vmem:[%s0 + $0x68] sm:$0xff]
  %v30 = vld [vmem:[%s0 + $0x70] sm:$0xff]
  %v31 = vld [vmem:[%s0 + $0x78] sm:$0xff]
  %v32 = vld [vmem:[%s0 + $0x80] sm:$0xff]
  %v33 = vld [vmem:[%s0 + $0x88] sm:$0xff]
  %v34 = vld [vmem:[%s2] sm:$0xf]
  %36 = vset.pattern.permute.xlu0 0
  %37 = vperm.xlu0 %36, %v34
  %v38 = vpop.permute.xlu0 %37
  %v58 = vunpack.c.l.b16 %v16
  %v59 = vunpack.c.h.b16 %v16
  %v60 = vunpack.c.l.b16 %v17
  %v61 = vunpack.c.h.b16 %v17
  %v62 = vunpack.c.l.b16 %v18
  %v63 = vunpack.c.h.b16 %v18
  %v64 = vunpack.c.l.b16 %v19
  %v65 = vunpack.c.h.b16 %v19
  %v66 = vunpack.c.l.b16 %v20
  %v67 = vunpack.c.h.b16 %v20
  %v68 = vunpack.c.l.b16 %v21
  %v69 = vunpack.c.h.b16 %v21
  %v70 = vunpack.c.l.b16 %v22
  %v71 = vunpack.c.h.b16 %v22
  %v72 = vunpack.c.l.b16 %v23
  %v73 = vunpack.c.h.b16 %v23
  %v74 = vunpack.c.l.b16 %v24
  %v75 = vunpack.c.h.b16 %v24
  %v76 = vunpack.c.l.b16 %v25
  %v77 = vunpack.c.h.b16 %v25
  %v78 = vunpack.c.l.b16 %v26
  %v79 = vunpack.c.h.b16 %v26
  %v80 = vunpack.c.l.b16 %v27
  %v81 = vunpack.c.h.b16 %v27
  %v82 = vunpack.c.l.b16 %v28
  %v83 = vunpack.c.h.b16 %v28
  %v84 = vunpack.c.l.b16 %v29
  %v85 = vunpack.c.h.b16 %v29
  %v86 = vunpack.c.l.b16 %v30
  %v87 = vunpack.c.h.b16 %v30
  %v88 = vunpack.c.l.b16 %v31
  %v89 = vunpack.c.h.b16 %v31
  %v90 = vunpack.c.l.b16 %v32
  %v91 = vunpack.c.h.b16 %v32
  %v92 = vunpack.c.l.b16 %v33
  %v93 = vunpack.c.h.b16 %v33
  %v94 = vpack.c.b16 %v62, %v58
  %v95 = vpack.c.b16 %v63, %v59
  %v96 = vpack.c.b16 %v64, %v60
  %v97 = vpack.c.b16 %v65, %v61
  %v98 = vpack.c.b16 %v70, %v66
  %v99 = vpack.c.b16 %v71, %v67
  %v100 = vpack.c.b16 %v72, %v68
  %v101 = vpack.c.b16 %v73, %v69
  %v102 = vpack.c.b16 %v78, %v74
  %v103 = vpack.c.b16 %v79, %v75
  %v104 = vpack.c.b16 %v80, %v76
  %v105 = vpack.c.b16 %v81, %v77
  %v106 = vpack.c.b16 %v86, %v82
  %v107 = vpack.c.b16 %v87, %v83
  %v108 = vpack.c.b16 %v88, %v84
  %v109 = vpack.c.b16 %v89, %v85
  %v110 = vpack.c.b16 %v90, %v90
  %v111 = vpack.c.b16 %v91, %v91
  %v112 = vpack.c.b16 %v92, %v92
  %v113 = vpack.c.b16 %v93, %v93
  %vm130 = vcmask 588800
  %v132 = vsel %vm130, %v15, 0
  %vm134 = vcmask 1043456
  %v136 = vsel %vm134, %v110, 0
  %v139 = vsel %vm134, %v111, 0
  %v142 = vsel %vm134, %v112, 0
  %v145 = vsel %vm134, %v113, 0
  %147 = vmatprep.subr.bf16.mxu0 %v95
  %148 = vmatpush1.bf16.msra.mxu0 %v94
  %149 = vmatprep.subr.bf16.mxu0 %v99
  %150 = vmatpush1.bf16.msra.mxu0 %v98
  %151 = vmatprep.subr.bf16.mxu0 %v103
  %152 = vmatpush1.bf16.msra.mxu0 %v102
  %153 = vmatprep.subr.bf16.mxu0 %v107
  %154 = vmatpush1.bf16.msra.mxu0 %v106
  %155 = vmatprep.subr.bf16.mxu0 %v139
  %156 = vmatpush1.bf16.msra.mxu0 %v136
  %157 = vmatprep.subr.bf16.mxu0 0
  %158 = vmatpush1.bf16.msra.mxu0 0
  %159 = vmatprep.subr.bf16.mxu0 0
  %160 = vmatpush1.bf16.msra.mxu0 0
  %161 = vmatprep.subr.bf16.mxu0 0
  %162 = vmatpush1.bf16.msra.mxu0 0
  %163 = vmatprep.subr.bf16.mxu0 0
  %164 = vmatpush1.bf16.msra.mxu0 0
  %165 = vmatprep.subr.bf16.mxu0 0
  %166 = vmatpush1.bf16.msra.mxu0 0
  %167 = vmatprep.subr.bf16.mxu0 0
  %168 = vmatpush1.bf16.msra.mxu0 0
  %169 = vmatprep.subr.bf16.mxu0 0
  %170 = vmatpush1.bf16.msra.mxu0 0
  %171 = vmatprep.subr.bf16.mxu0 0
  %172 = vmatpush1.bf16.msra.mxu0 0
  %173 = vmatprep.subr.bf16.mxu0 0
  %174 = vmatpush1.bf16.msra.mxu0 0
  %175 = vmatprep.subr.bf16.mxu0 0
  %176 = vmatpush1.bf16.msra.mxu0 0
  %177 = vmatprep.subr.bf16.mxu0 0
  %178 = vmatpush1.bf16.msra.mxu0 0
  %179 = vmatprep.mubr.bf16.mxu0 0
  %180 = vmatmul.mubr.bf16.gmra.mrb[0].mxu0 %v132
  %v181 = vpop.f32.mrb[0].mxu0
  %v182 = vadd.f32 %v38, %v181
  %v183 = vpop.f32.mrb[0].mxu0
  %v184 = vadd.f32 %v38, %v183
  %v185 = vpop.f32.mrb[0].mxu0
  %v186 = vpop.f32.mrb[0].mxu0
  %187 = vdwg.mxu0
  %188 = vmatprep.subr.bf16.mxu0 %v97
  %189 = vmatpush1.bf16.msra.mxu0 %v96
  %190 = vmatprep.subr.bf16.mxu0 %v101
  %191 = vmatpush1.bf16.msra.mxu0 %v100
  %192 = vmatprep.subr.bf16.mxu0 %v105
  %193 = vmatpush1.bf16.msra.mxu0 %v104
  %194 = vmatprep.subr.bf16.mxu0 %v109
  %195 = vmatpush1.bf16.msra.mxu0 %v108
  %196 = vmatprep.subr.bf16.mxu0 %v145
  %197 = vmatpush1.bf16.msra.mxu0 %v142
  %198 = vmatprep.subr.bf16.mxu0 0
  %199 = vmatpush1.bf16.msra.mxu0 0
  %200 = vmatprep.subr.bf16.mxu0 0
  %201 = vmatpush1.bf16.msra.mxu0 0
  %202 = vmatprep.subr.bf16.mxu0 0
  %203 = vmatpush1.bf16.msra.mxu0 0
  %204 = vmatprep.subr.bf16.mxu0 0
  %205 = vmatpush1.bf16.msra.mxu0 0
  %206 = vmatprep.subr.bf16.mxu0 0
  %207 = vmatpush1.bf16.msra.mxu0 0
  %208 = vmatprep.subr.bf16.mxu0 0
  %209 = vmatpush1.bf16.msra.mxu0 0
  %210 = vmatprep.subr.bf16.mxu0 0
  %211 = vmatpush1.bf16.msra.mxu0 0
  %212 = vmatprep.subr.bf16.mxu0 0
  %213 = vmatpush1.bf16.msra.mxu0 0
  %214 = vmatprep.subr.bf16.mxu0 0
  %215 = vmatpush1.bf16.msra.mxu0 0
  %216 = vmatprep.subr.bf16.mxu0 0
  %217 = vmatpush1.bf16.msra.mxu0 0
  %218 = vmatprep.subr.bf16.mxu0 0
  %219 = vmatpush1.bf16.msra.mxu0 0
  %220 = vmatprep.mubr.bf16.mxu0 0
  %221 = vmatmul.mubr.bf16.gmra.mrb[0].mxu0 %v132
  %v222 = vpop.f32.mrb[0].mxu0
  %v223 = vadd.f32 %v38, %v222
  %v224 = vpop.f32.mrb[0].mxu0
  %v225 = vadd.f32 %v38, %v224
  %v226 = vpop.f32.mrb[0].mxu0
  %v227 = vpop.f32.mrb[0].mxu0
  %228 = vdwg.mxu0
  %v233 = vcombine.low %v182, %v184
  %v234 = vcombine.low %v223, %v225
  %237 = vst [vmem:[%s3] sm:$0xff] %v233
  %238 = vst [vmem:[%s3 + $0x8] sm:$0xff] %v234
  // Predicated region
  $region14: #{cae_forward.7} parent=0 // pred_check
    _
  $region15: #{cae_forward.7} parent=0 // pred_check_branch
    %240 = sbr.rel (0) target = $region17
  $region16: #{cae_forward.7} parent=0 // pred_region
    _
  $region17: #{cae_forward.7} parent=0 // pred_fallthru
    _
  // Predicated region
  $region18: #{cae_forward.7} parent=0 // pred_check
    _
  $region19: #{cae_forward.7} parent=0 // pred_check_branch
    %242 = sbr.rel (0) target = $region21
  $region20: #{cae_forward.7} parent=0 // pred_region
    _
  $region21: #{cae_forward.7} parent=0 // pred_fallthru
    _

</llo_original>
